<compile_context>
chip_gen: v7x
topology: tpu7x:2x2x1
jax: 0.10.0
libtpu: 0.0.40
codegen_flags: <defaults>
</compile_context>

<pallas_src>
import jax
import jax.numpy as jnp
import numpy as np
from jax.experimental import pallas as pl
from jax.experimental.pallas import tpu as pltpu

_LANES = 128           # vreg lane width: last dim lane-dense -> unmasked stores
_MAX_TILE_ROWS = 1024  # (1024, 128) f32 = 512 KiB/buffer; in+out double-buffered
                       # ≈ 2 MiB, well inside v7x's scoped VMEM.


def _cdiv(a, b):
    return -(-a // b)


def _round_up(a, b):
    return _cdiv(a, b) * b


def _linear1x1_kernel(wb_ref, x_ref, o_ref):
    # y = x * w + b.  in_features == out_features == 1, so the Linear
    # degenerates to an elementwise affine map: keep it on the f32 VPU
    # (no degenerate 1x1 MXU dot, no bf16 — v5e has no bf16 VPU path and the
    # kernel is HBM-bandwidth bound anyway).
    w = wb_ref[0]  # scalar from SMEM
    b = wb_ref[1]  # scalar from SMEM
    o_ref[...] = x_ref[...] * w + b


@jax.jit
def linear_1x1_pallas(x, wb):
    """Pallas nn.Linear(1, 1): x of shape (N, 1), wb of shape (2,) = [w, b]."""
    n, f = x.shape
    assert f == 1, "nn.Linear(1, 1) expects a single input feature"

    # Lane-dense layout: (N, 1) -> (rows, 128), rows a multiple of the tile.
    rows_needed = max(1, _cdiv(n, _LANES))
    tile_rows = min(_MAX_TILE_ROWS, max(8, _round_up(rows_needed, 8)))
    rows = _round_up(rows_needed, tile_rows)
    num_tiles = rows // tile_rows

    x_flat = x.reshape(-1).astype(jnp.float32)
    x_pad = jnp.pad(x_flat, (0, rows * _LANES - n))
    x2d = x_pad.reshape(rows, _LANES)

    out2d = pl.pallas_call(
        _linear1x1_kernel,
        out_shape=jax.ShapeDtypeStruct((rows, _LANES), jnp.float32),
        grid=(num_tiles,),
        in_specs=[
            # (2,) [w, b] resident in SMEM: single tiny DMA, built once outside
            # the hot path (no per-call concatenate).
            pl.BlockSpec(memory_space=pltpu.MemorySpace.SMEM),
            # Batch tiled over a 1-D grid -> double-buffered HBM<->VMEM pipeline.
            pl.BlockSpec((tile_rows, _LANES), lambda i: (i, 0)),
        ],
        out_specs=pl.BlockSpec((tile_rows, _LANES), lambda i: (i, 0)),
        compiler_params=pltpu.CompilerParams(
            # Batch tiles are independent: shard across v7x's 2 TensorCores.
            dimension_semantics=("parallel",),
            vmem_limit_bytes=32 * 1024 * 1024,
        ),
    )(wb, x2d)

    # Undo the layout plumbing (reshape + slice; fused under jit).
    return out2d.reshape(-1)[:n].reshape(n, 1)


class MockModelPallas:
    """JAX/Pallas mirror of the PyTorch MockModel."""

    def __init__(self):
        # Deterministic init of the nn.Linear(1, 1) parameters.
        self.weight = jnp.array([[0.5]], dtype=jnp.float32)  # (out=1, in=1)
        self.bias = jnp.array([0.25], dtype=jnp.float32)     # (1,)
        # Pack [w, b] ONCE, outside the per-call hot path.
        self.wb = jnp.concatenate(
            [self.weight.reshape(1), self.bias.reshape(1)]
        ).astype(jnp.float32)

    def field(self, x):
        # The Linear(1, 1) sub-module, computed with the Pallas kernel.
        return linear_1x1_pallas(x, self.wb)

    def forward(self, *input_, **kwargs):
        # Matches the reference forward exactly: no compute, returns None.
        return None

    __call__ = forward


if __name__ == "__main__":
    key = jax.random.PRNGKey(0)
    x = jax.random.normal(key, (2, 1), dtype=jnp.float32)  # (batch=2, features=1)

    model = MockModelPallas()

    # Forward-path semantics: returns None, like the PyTorch module.
    fwd_out = model(x)
    assert fwd_out is None

    # Exercise the Pallas kernel implementing the module's Linear(1, 1).
    y = jax.block_until_ready(model.field(x))

    y_ref = np.asarray(x) * float(model.weight[0, 0]) + float(model.bias[0])
    np.testing.assert_allclose(np.asarray(y), y_ref, rtol=1e-6, atol=1e-6)

    print("KERNEL_OK")
</pallas_src>

<mosaic_0001>
module attributes {stable_mosaic.version = 11 : i64} {
  func.func @_linear1x1_kernel(%arg0: i32, %arg1: memref<2xf32, #tpu.memory_space<smem>>, %arg2: memref<8x128xf32, #tpu.memory_space<vmem>>, %arg3: memref<8x128xf32, #tpu.memory_space<vmem>>) attributes {dimension_semantics = [#tpu.dimension_semantics<parallel>], iteration_bounds = array<i64: 1>, scalar_prefetch = 0 : i64, scratch_operands = 0 : i64, tpu.core_type = #tpu.core_type<tc>, window_params = [{transform_indices = @transform_0, window_bounds = array<i64: 2>}, {transform_indices = @transform_1, window_bounds = array<i64: 8, 128>}, {transform_indices = @transform_2, window_bounds = array<i64: 8, 128>}]} {
    %c0 = arith.constant 0 : index
    %0 = memref.load %arg1[%c0] : memref<2xf32, #tpu.memory_space<smem>>
    %c1 = arith.constant 1 : index
    %1 = memref.load %arg1[%c1] : memref<2xf32, #tpu.memory_space<smem>>
    %c0_0 = arith.constant 0 : index
    %c0_1 = arith.constant 0 : index
    %2 = vector.load %arg2[%c0_0, %c0_1] : memref<8x128xf32, #tpu.memory_space<vmem>>, vector<8x128xf32>
    %3 = vector.broadcast %0 : f32 to vector<8x128xf32>
    %4 = arith.mulf %2, %3 : vector<8x128xf32>
    %5 = vector.broadcast %1 : f32 to vector<8x128xf32>
    %6 = arith.addf %4, %5 : vector<8x128xf32>
    %c0_2 = arith.constant 0 : index
    %c0_3 = arith.constant 0 : index
    %7 = vector.load %arg3[%c0_2, %c0_3] : memref<8x128xf32, #tpu.memory_space<vmem>>, vector<8x128xf32>
    tpu.vector_store %arg3[%c0_2, %c0_3], %6 {strides = array<i32>} : memref<8x128xf32, #tpu.memory_space<vmem>>, vector<8x128xf32>,
    return
  }
  func.func @transform_0(%arg0: i32) -> i32 {
    %c0_i32 = arith.constant 0 : i32
    %c0_i32_0 = arith.constant 0 : i32
    return %c0_i32 : i32
  }
  func.func @transform_1(%arg0: i32) -> (i32, i32) {
    %c0_i32 = arith.constant 0 : i32
    %c0_i32_0 = arith.constant 0 : i32
    return %arg0, %c0_i32 : i32, i32
  }
  func.func @transform_2(%arg0: i32) -> (i32, i32) {
    %c0_i32 = arith.constant 0 : i32
    %c0_i32_0 = arith.constant 0 : i32
    return %arg0, %c0_i32 : i32, i32
  }
}

</mosaic_0001>

<llo_original>
// kernel: linear_1x1_pallas.1
$region0: #{linear_1x1_pallas.1}
  #allocation0 [shape = 'u32[]', space=smem, size = 0x4, offset = 0x4, fixed_abs, tag = 'smem constant byte address 0x4 - core index']
  #allocation1 [shape = 'u32[144,128]{1,0:T(1,128)}', space=vmem, size = 0x12000, scoped, tag = 'internal scratch']
  %s0 = inlined_call_operand.vmem [shape: f32[2], index: 0, kind: input, shape index: {}]
  %s1 = inlined_call_operand.vmem [shape: f32[8,128], index: 1, kind: input, shape index: {}]
  %s2 = inlined_call_operand.vmem [shape: f32[8,128], index: 2, kind: output, shape index: {}]
  %s3 = sld [smem:[#allocation0]]
  $region22: #{linear_1x1_pallas.1} parent=0
    _
  %s5 = ssub.s32 1, %s3
  %s6 = scalar_select 0, %s5, %s3
  $region1: #{linear_1x1_pallas.1} parent=0
    #allocation2 [shape = 'u8[512]{0}', space=smem, size = 0x200, scoped, tag = 'input window, operand 0, single buffered']
    #allocation3 [shape = 's32[1]{0}', space=sflag, size = 0x4, scoped, tag = 'scoped memory for linear_1x1_pallas.1']
    %7 = vsyncpa [#allocation3], 0
    // Predicated region
    $region2: #{linear_1x1_pallas.1} parent=1 // pred_check
      _
    $region3: #{linear_1x1_pallas.1} parent=1 // pred_check_branch
      %9 = sbr.rel (0) target = $region5
    $region4: #{linear_1x1_pallas.1} parent=1 // pred_region
      %s11 = ssub.s32 16, 16
      %12 = vsyncadd [#allocation3], %s11
      %s14 = sshll.u32 %s0, 4
      %s15 = int_to_ptr.vmem [resolvable:$true] %s14
      %17 = dma.vmem_to_smem %s15, 16, [#allocation2], [#allocation3]
    $region5: #{linear_1x1_pallas.1} parent=1 // pred_fallthru
      _
    // Predicated region
    $region6: #{linear_1x1_pallas.1} parent=1 // pred_check
      _
    $region7: #{linear_1x1_pallas.1} parent=1 // pred_check_branch
      %19 = sbr.rel (0) target = $region9
    $region8: #{linear_1x1_pallas.1} parent=1 // pred_region
      _
    $region9: #{linear_1x1_pallas.1} parent=1 // pred_fallthru
      _
    // Predicated region
    $region10: #{linear_1x1_pallas.1} parent=1 // pred_check
      _
    $region11: #{linear_1x1_pallas.1} parent=1 // pred_check_branch
      %21 = sbr.rel (0) target = $region13
    $region12: #{linear_1x1_pallas.1} parent=1 // pred_region
      %22 = dma.done [#allocation3], 16
    $region13: #{linear_1x1_pallas.1} parent=1 // pred_fallthru
      _
    %23 = sfence
    %s24 = sld [smem:[#allocation2]]
    %s25 = sld [smem:[#allocation2 + $0x1]]
    %v26 = vld [vmem:[%s1] sm:$0xff]
    %v27 = vstv %s24
    %v28 = vmul.f32 %v26, %v27
    %v29 = vstv %s25
    %v30 = vadd.f32 %v28, %v29
    %31 = vst [vmem:[%s2] sm:$0xff] %v30
    // Predicated region
    $region14: #{linear_1x1_pallas.1} parent=1 // pred_check
      _
    $region15: #{linear_1x1_pallas.1} parent=1 // pred_check_branch
      %33 = sbr.rel (0) target = $region17
    $region16: #{linear_1x1_pallas.1} parent=1 // pred_region
      _
    $region17: #{linear_1x1_pallas.1} parent=1 // pred_fallthru
      _
    // Predicated region
    $region18: #{linear_1x1_pallas.1} parent=1 // pred_check
      _
    $region19: #{linear_1x1_pallas.1} parent=1 // pred_check_branch
      %35 = sbr.rel (0) target = $region21
    $region20: #{linear_1x1_pallas.1} parent=1 // pred_region
      _
    $region21: #{linear_1x1_pallas.1} parent=1 // pred_fallthru
      _
    %36 = vsyncpa [#allocation3], 1

</llo_original>
